<compile_context>
chip_gen: v6e
topology: v6e:2x2x1
jax: 0.10.0
libtpu: 0.0.40
codegen_flags: <defaults>
</compile_context>

<pallas_src>
import functools

import jax
import jax.numpy as jnp
from jax.experimental import pallas as pl
from jax.experimental.pallas import tpu as pltpu


# ------------------------------ configuration ------------------------------

C_IN, H_IMG, W_IMG = 4, 16, 16   # small demo shapes
KH = KW = 3                      # conv kernel
C_MID = 128                      # conv width -> one full lane row
LATENT = 128                     # stand-in for latent_dim=2048
OUTDIM = 2                       # module default out_dim
OUT_PAD = 128                    # classifier output padded to a full lane width
K_PAD = 128                      # im2col K (= KH*KW*C_IN) zero-padded lane-dense
M_CHUNK = 128                    # conv M-tile processed per inner step


# ------------------------------ fused kernel -------------------------------

def _forward_kernel(patch_ref, wconv_ref, bconv_ref, whead_ref, bhead_ref,
                    out_ref, *, n, hw, m_chunk):
    """Fused im2col-conv3x3 (+bias+ReLU) + sum-pool + combined head, one step.

    patch_ref : (n*hw, K_PAD) bf16   im2col patches (zero-padded K)
    wconv_ref : (K_PAD, C_MID) bf16  flattened conv weight (zero-padded rows)
    bconv_ref : (1, C_MID) f32
    whead_ref : (C_MID, OUT_PAD) bf16  == (w_fc / hw) @ w_cls (composed in f32)
    bhead_ref : (1, OUT_PAD) f32
    out_ref   : (n, OUT_PAD) f32
    """
    wconv = wconv_ref[...]
    bconv = bconv_ref[...]
    c_mid = wconv.shape[-1]

    pooled_rows = []
    for i in range(n):                               # tiny static unroll (n*hw/m_chunk steps)
        acc = jnp.zeros((1, c_mid), jnp.float32)
        for j in range(hw // m_chunk):
            r0 = i * hw + j * m_chunk                # static slice -> zero-cost view
            blk = patch_ref[r0:r0 + m_chunk, :]      # (m_chunk, K_PAD) bf16
            hb = jnp.dot(blk, wconv,                 # single MXU call, K accumulated in-MXU
                         preferred_element_type=jnp.float32)
            hb = jnp.maximum(hb + bconv, 0.0)        # bias + ReLU in f32 (VPU)
            acc = acc + jnp.sum(hb, axis=0, keepdims=True)   # sublane reduce (XLU)
        pooled_rows.append(acc)                      # GAP 1/(H*W) scale folded into w_head

    pooled = jnp.concatenate(pooled_rows, axis=0)    # (n, C_MID) f32
    pred = (jnp.dot(pooled.astype(jnp.bfloat16), whead_ref[...],
                    preferred_element_type=jnp.float32) + bhead_ref[...])
    out_ref[...] = pred.astype(out_ref.dtype)        # (n, OUT_PAD) lane-dense store


# ------------------------------- wrapper ------------------------------------

def water_backbone_only(params, x_nchw):
    """forward(x): _, fea = backbone(x); prediction = fc(fea)."""
    N, C, H, W = x_nchw.shape
    assert (H * W) % M_CHUNK == 0 and KH * KW * C <= K_PAD

    # Wrapper side is layout plumbing only: spatial pad, NCHW->NHWC, im2col,
    # zero-pad K to a full lane width, bf16 cast (halves the input DMA bytes).
    xpad = jnp.pad(x_nchw, ((0, 0), (0, 0), (1, 1), (1, 1)))
    xpad = jnp.transpose(xpad, (0, 2, 3, 1))                       # [N, H+2, W+2, C]
    taps = [xpad[:, di:di + H, dj:dj + W, :]
            for di in range(KH) for dj in range(KW)]
    patch = jnp.concatenate(taps, axis=-1).reshape(N * H * W, KH * KW * C)
    patch = jnp.pad(patch, ((0, 0), (0, K_PAD - KH * KW * C)))
    patch = patch.astype(jnp.bfloat16)                             # (N*H*W, 128) lane-dense

    out = pl.pallas_call(
        functools.partial(_forward_kernel, n=N, hw=H * W, m_chunk=M_CHUNK),
        out_shape=jax.ShapeDtypeStruct((N, OUT_PAD), jnp.float32),
        # Single step, everything resident in VMEM (total footprint < 1 MiB).
        in_specs=[pl.BlockSpec(memory_space=pltpu.MemorySpace.VMEM)] * 5,
        out_specs=pl.BlockSpec(memory_space=pltpu.MemorySpace.VMEM),
    )(patch, params["w_conv"], params["b_conv"],
      params["w_head"], params["b_head"])

    return out[:, :OUTDIM]


# ------------------------------- parameters ---------------------------------

def init_params(key, c_in=C_IN, c_mid=C_MID, latent=LATENT, outdim=OUTDIM,
                hw=H_IMG * W_IMG):
    k1, k2, k3 = jax.random.split(key, 3)

    def lin(rng, fan_in, shape):
        return (jax.random.normal(rng, shape, jnp.float32)
                / jnp.sqrt(jnp.float32(fan_in)))

    # Conv taps [tap, c_in, c_mid] with tap = di*KW + dj; to import a PyTorch
    # Conv2d weight Wt[c_out, c_in, kh, kw]:
    #   w_taps[di*KW + dj, c, m] = Wt[m, c, di, dj]
    # then flatten to K = tap*C + c and zero-pad rows to K_PAD.
    w_taps = lin(k1, c_in * KH * KW, (KH * KW, c_in, c_mid))
    w_conv = jnp.zeros((K_PAD, c_mid), jnp.float32)
    w_conv = w_conv.at[:KH * KW * c_in].set(w_taps.reshape(KH * KW * c_in, c_mid))
    b_conv = jnp.zeros((1, c_mid), jnp.float32)

    # Backbone FC (c_mid -> latent) and FConly classifier (latent -> outdim),
    # composed in f32 with the GAP 1/(H*W) scale folded in (valid: no
    # nonlinearity between them, test mode).
    w_fc = lin(k2, c_mid, (c_mid, latent))
    b_fc = jnp.zeros((1, latent), jnp.float32)
    w_cls = lin(k3, latent, (latent, outdim))
    b_cls = jnp.zeros((1, outdim), jnp.float32)

    w_head = jnp.zeros((c_mid, OUT_PAD), jnp.float32)
    w_head = w_head.at[:, :outdim].set((w_fc / hw) @ w_cls)
    b_head = jnp.zeros((1, OUT_PAD), jnp.float32)
    b_head = b_head.at[:, :outdim].set(b_fc @ w_cls + b_cls)

    return {
        # MXU operands stored bf16; biases stay f32 (elementwise math in f32).
        "w_conv": w_conv.astype(jnp.bfloat16),
        "b_conv": b_conv,
        "w_head": w_head.astype(jnp.bfloat16),
        "b_head": b_head,
    }


# --------------------------------- demo -------------------------------------

if __name__ == "__main__":
    key = jax.random.PRNGKey(0)
    k_params, k_x = jax.random.split(key)
    params = init_params(k_params)
    x = jax.random.normal(k_x, (2, C_IN, H_IMG, W_IMG), jnp.float32)  # [N, C, H, W]

    pred = jax.jit(water_backbone_only)(params, x)
    jax.block_until_ready(pred)

    assert pred.shape == (2, OUTDIM) and pred.dtype == jnp.float32
    assert bool(jnp.all(jnp.isfinite(pred)))
    print("KERNEL_OK")
</pallas_src>

<mosaic_0001>
module attributes {stable_mosaic.version = 11 : i64} {
  func.func @_forward_kernel(%arg0: memref<512x128xbf16, #tpu.memory_space<vmem>>, %arg1: memref<128x128xbf16, #tpu.memory_space<vmem>>, %arg2: memref<1x128xf32, #tpu.memory_space<vmem>>, %arg3: memref<128x128xbf16, #tpu.memory_space<vmem>>, %arg4: memref<1x128xf32, #tpu.memory_space<vmem>>, %arg5: memref<2x128xf32, #tpu.memory_space<vmem>>) attributes {dimension_semantics = [], scalar_prefetch = 0 : i64, scratch_operands = 0 : i64, tpu.core_type = #tpu.core_type<tc>} {
    %c0 = arith.constant 0 : index
    %c0_0 = arith.constant 0 : index
    %0 = vector.load %arg1[%c0, %c0_0] : memref<128x128xbf16, #tpu.memory_space<vmem>>, vector<128x128xbf16>
    %c0_1 = arith.constant 0 : index
    %c0_2 = arith.constant 0 : index
    %1 = vector.load %arg2[%c0_1, %c0_2] : memref<1x128xf32, #tpu.memory_space<vmem>>, vector<1x128xf32>
    %cst = arith.constant 0.000000e+00 : f32
    %2 = vector.broadcast %cst : f32 to vector<1x128xf32>
    %c0_3 = arith.constant 0 : index
    %c0_4 = arith.constant 0 : index
    %3 = vector.load %arg0[%c0_3, %c0_4] : memref<512x128xbf16, #tpu.memory_space<vmem>>, vector<128x128xbf16>
    %cst_5 = arith.constant dense<0.000000e+00> : vector<128x128xf32>
    %4 = tpu.matmul %3, %0, %cst_5 {dimension_numbers = #tpu.dot_dimension_numbers<[1], [0], [0], [1], [0, 0, 1, 1], [], []>} : vector<128x128xbf16>, vector<128x128xbf16>, vector<128x128xf32> -> vector<128x128xf32>
    %5 = vector.broadcast %1 : vector<1x128xf32> to vector<128x128xf32>
    %6 = arith.addf %4, %5 : vector<128x128xf32>
    %cst_6 = arith.constant 0.000000e+00 : f32
    %7 = vector.broadcast %cst_6 : f32 to vector<128x128xf32>
    %8 = arith.maximumf %6, %7 : vector<128x128xf32>
    %cst_7 = arith.constant dense<0.000000e+00> : vector<128xf32>
    %9 = vector.multi_reduction <add>, %8, %cst_7 [0] : vector<128x128xf32> to vector<128xf32>
    %10 = vector.shape_cast %9 : vector<128xf32> to vector<1x128xf32>
    %11 = arith.addf %2, %10 : vector<1x128xf32>
    %c128 = arith.constant 128 : index
    %c0_8 = arith.constant 0 : index
    %12 = vector.load %arg0[%c128, %c0_8] : memref<512x128xbf16, #tpu.memory_space<vmem>>, vector<128x128xbf16>
    %cst_9 = arith.constant dense<0.000000e+00> : vector<128x128xf32>
    %13 = tpu.matmul %12, %0, %cst_9 {dimension_numbers = #tpu.dot_dimension_numbers<[1], [0], [0], [1], [0, 0, 1, 1], [], []>} : vector<128x128xbf16>, vector<128x128xbf16>, vector<128x128xf32> -> vector<128x128xf32>
    %14 = vector.broadcast %1 : vector<1x128xf32> to vector<128x128xf32>
    %15 = arith.addf %13, %14 : vector<128x128xf32>
    %cst_10 = arith.constant 0.000000e+00 : f32
    %16 = vector.broadcast %cst_10 : f32 to vector<128x128xf32>
    %17 = arith.maximumf %15, %16 : vector<128x128xf32>
    %cst_11 = arith.constant dense<0.000000e+00> : vector<128xf32>
    %18 = vector.multi_reduction <add>, %17, %cst_11 [0] : vector<128x128xf32> to vector<128xf32>
    %19 = vector.shape_cast %18 : vector<128xf32> to vector<1x128xf32>
    %20 = arith.addf %11, %19 : vector<1x128xf32>
    %cst_12 = arith.constant 0.000000e+00 : f32
    %21 = vector.broadcast %cst_12 : f32 to vector<1x128xf32>
    %c256 = arith.constant 256 : index
    %c0_13 = arith.constant 0 : index
    %22 = vector.load %arg0[%c256, %c0_13] : memref<512x128xbf16, #tpu.memory_space<vmem>>, vector<128x128xbf16>
    %cst_14 = arith.constant dense<0.000000e+00> : vector<128x128xf32>
    %23 = tpu.matmul %22, %0, %cst_14 {dimension_numbers = #tpu.dot_dimension_numbers<[1], [0], [0], [1], [0, 0, 1, 1], [], []>} : vector<128x128xbf16>, vector<128x128xbf16>, vector<128x128xf32> -> vector<128x128xf32>
    %24 = vector.broadcast %1 : vector<1x128xf32> to vector<128x128xf32>
    %25 = arith.addf %23, %24 : vector<128x128xf32>
    %cst_15 = arith.constant 0.000000e+00 : f32
    %26 = vector.broadcast %cst_15 : f32 to vector<128x128xf32>
    %27 = arith.maximumf %25, %26 : vector<128x128xf32>
    %cst_16 = arith.constant dense<0.000000e+00> : vector<128xf32>
    %28 = vector.multi_reduction <add>, %27, %cst_16 [0] : vector<128x128xf32> to vector<128xf32>
    %29 = vector.shape_cast %28 : vector<128xf32> to vector<1x128xf32>
    %30 = arith.addf %21, %29 : vector<1x128xf32>
    %c384 = arith.constant 384 : index
    %c0_17 = arith.constant 0 : index
    %31 = vector.load %arg0[%c384, %c0_17] : memref<512x128xbf16, #tpu.memory_space<vmem>>, vector<128x128xbf16>
    %cst_18 = arith.constant dense<0.000000e+00> : vector<128x128xf32>
    %32 = tpu.matmul %31, %0, %cst_18 {dimension_numbers = #tpu.dot_dimension_numbers<[1], [0], [0], [1], [0, 0, 1, 1], [], []>} : vector<128x128xbf16>, vector<128x128xbf16>, vector<128x128xf32> -> vector<128x128xf32>
    %33 = vector.broadcast %1 : vector<1x128xf32> to vector<128x128xf32>
    %34 = arith.addf %32, %33 : vector<128x128xf32>
    %cst_19 = arith.constant 0.000000e+00 : f32
    %35 = vector.broadcast %cst_19 : f32 to vector<128x128xf32>
    %36 = arith.maximumf %34, %35 : vector<128x128xf32>
    %cst_20 = arith.constant dense<0.000000e+00> : vector<128xf32>
    %37 = vector.multi_reduction <add>, %36, %cst_20 [0] : vector<128x128xf32> to vector<128xf32>
    %38 = vector.shape_cast %37 : vector<128xf32> to vector<1x128xf32>
    %39 = arith.addf %30, %38 : vector<1x128xf32>
    %40 = tpu.concatenate %20, %39 in 0 : vector<1x128xf32>, vector<1x128xf32> -> vector<2x128xf32>
    %41 = arith.truncf %40 : vector<2x128xf32> to vector<2x128xbf16>
    %c0_21 = arith.constant 0 : index
    %c0_22 = arith.constant 0 : index
    %42 = vector.load %arg3[%c0_21, %c0_22] : memref<128x128xbf16, #tpu.memory_space<vmem>>, vector<128x128xbf16>
    %cst_23 = arith.constant dense<0.000000e+00> : vector<2x128xf32>
    %43 = tpu.matmul %41, %42, %cst_23 {dimension_numbers = #tpu.dot_dimension_numbers<[1], [0], [0], [1], [0, 0, 1, 1], [], []>} : vector<2x128xbf16>, vector<128x128xbf16>, vector<2x128xf32> -> vector<2x128xf32>
    %c0_24 = arith.constant 0 : index
    %c0_25 = arith.constant 0 : index
    %44 = vector.load %arg4[%c0_24, %c0_25] : memref<1x128xf32, #tpu.memory_space<vmem>>, vector<1x128xf32>
    %45 = vector.broadcast %44 : vector<1x128xf32> to vector<2x128xf32>
    %46 = arith.addf %43, %45 : vector<2x128xf32>
    %c0_26 = arith.constant 0 : index
    %c0_27 = arith.constant 0 : index
    %47 = vector.load %arg5[%c0_26, %c0_27] : memref<2x128xf32, #tpu.memory_space<vmem>>, vector<2x128xf32>
    tpu.vector_store %arg5[%c0_26, %c0_27], %46 {strides = array<i32>} : memref<2x128xf32, #tpu.memory_space<vmem>>, vector<2x128xf32>,
    return
  }
}

</mosaic_0001>

<llo_original>
// kernel: water_backbone_only.1
$region0: #{water_backbone_only.1}
  #allocation0 [shape = 'u32[]', space=smem, size = 0x4, offset = 0x4, fixed_abs, tag = 'smem constant byte address 0x4 - core index']
  #allocation1 [shape = 'u32[144,128]{1,0:T(1,128)}', space=vmem, size = 0x12000, scoped, tag = 'internal scratch']
  %s0 = inlined_call_operand.vmem [shape: bf16[512,128], index: 0, kind: input, shape index: {}]
  %s1 = inlined_call_operand.vmem [shape: bf16[128,128], index: 1, kind: input, shape index: {}]
  %s2 = inlined_call_operand.vmem [shape: f32[1,128], index: 2, kind: input, shape index: {}]
  %s3 = inlined_call_operand.vmem [shape: bf16[128,128], index: 3, kind: input, shape index: {}]
  %s4 = inlined_call_operand.vmem [shape: f32[1,128], index: 4, kind: input, shape index: {}]
  %s5 = inlined_call_operand.hbm [shape: f32[2,128], index: 5, kind: output, shape index: {}]
  %s6 = sld [smem:[#allocation0]]
  $region30: #{water_backbone_only.1} parent=0
    _
  %s8 = ssub.s32 1, %s6
  %s9 = scalar_select 0, %s8, %s6
  $region1: #{water_backbone_only.1} parent=0
    #allocation2 [shape = 'u8[1024]{0}', space=vmem, size = 0x400, scoped, tag = 'output window, operand 0, single buffered']
    #allocation3 [shape = 's32[1]{0}', space=sflag, size = 0x4, scoped, tag = 'scoped memory for water_backbone_only.1']
    %10 = vsyncpa [#allocation3], 0
    // Predicated region
    $region2: #{water_backbone_only.1} parent=1 // pred_check
      _
    $region3: #{water_backbone_only.1} parent=1 // pred_check_branch
      %12 = sbr.rel (0) target = $region5
    $region4: #{water_backbone_only.1} parent=1 // pred_region
      _
    $region5: #{water_backbone_only.1} parent=1 // pred_fallthru
      _
    // Predicated region
    $region6: #{water_backbone_only.1} parent=1 // pred_check
      _
    $region7: #{water_backbone_only.1} parent=1 // pred_check_branch
      %14 = sbr.rel (0) target = $region9
    $region8: #{water_backbone_only.1} parent=1 // pred_region
      _
    $region9: #{water_backbone_only.1} parent=1 // pred_fallthru
      _
    // Predicated region
    $region10: #{water_backbone_only.1} parent=1 // pred_check
      _
    $region11: #{water_backbone_only.1} parent=1 // pred_check_branch
      %16 = sbr.rel (0) target = $region13
    $region12: #{water_backbone_only.1} parent=1 // pred_region
      _
    $region13: #{water_backbone_only.1} parent=1 // pred_fallthru
      _
    // Predicated region
    $region14: #{water_backbone_only.1} parent=1 // pred_check
      _
    $region15: #{water_backbone_only.1} parent=1 // pred_check_branch
      %18 = sbr.rel (0) target = $region17
    $region16: #{water_backbone_only.1} parent=1 // pred_region
      _
    $region17: #{water_backbone_only.1} parent=1 // pred_fallthru
      _
    // Predicated region
    $region18: #{water_backbone_only.1} parent=1 // pred_check
      _
    $region19: #{water_backbone_only.1} parent=1 // pred_check_branch
      %20 = sbr.rel (0) target = $region21
    $region20: #{water_backbone_only.1} parent=1 // pred_region
      _
    $region21: #{water_backbone_only.1} parent=1 // pred_fallthru
      _
    %v22 = vld [vmem:[%s1] sm:$0xf]
    %v23 = vld [vmem:[%s1 + $0x4] sm:$0xf]
    %v24 = vld [vmem:[%s1 + $0x8] sm:$0xf]
    %v25 = vld [vmem:[%s1 + $0xc] sm:$0xf]
    %v26 = vld [vmem:[%s1 + $0x10] sm:$0xf]
    %v27 = vld [vmem:[%s1 + $0x14] sm:$0xf]
    %v28 = vld [vmem:[%s1 + $0x18] sm:$0xf]
    %v29 = vld [vmem:[%s1 + $0x1c] sm:$0xf]
    %v30 = vld [vmem:[%s1 + $0x20] sm:$0xf]
    %v31 = vld [vmem:[%s1 + $0x24] sm:$0xf]
    %v32 = vld [vmem:[%s1 + $0x28] sm:$0xf]
    %v33 = vld [vmem:[%s1 + $0x2c] sm:$0xf]
    %v34 = vld [vmem:[%s1 + $0x30] sm:$0xf]
    %v35 = vld [vmem:[%s1 + $0x34] sm:$0xf]
    %v36 = vld [vmem:[%s1 + $0x38] sm:$0xf]
    %v37 = vld [vmem:[%s1 + $0x3c] sm:$0xf]
    %v38 = vld [vmem:[%s2] sm:$0x1]
    %v39 = vld [vmem:[%s0] sm:$0xf]
    %v40 = vld [vmem:[%s0 + $0x4] sm:$0xf]
    %v41 = vld [vmem:[%s0 + $0x8] sm:$0xf]
    %v42 = vld [vmem:[%s0 + $0xc] sm:$0xf]
    %v43 = vld [vmem:[%s0 + $0x10] sm:$0xf]
    %v44 = vld [vmem:[%s0 + $0x14] sm:$0xf]
    %v45 = vld [vmem:[%s0 + $0x18] sm:$0xf]
    %v46 = vld [vmem:[%s0 + $0x1c] sm:$0xf]
    %v47 = vld [vmem:[%s0 + $0x20] sm:$0xf]
    %v48 = vld [vmem:[%s0 + $0x24] sm:$0xf]
    %v49 = vld [vmem:[%s0 + $0x28] sm:$0xf]
    %v50 = vld [vmem:[%s0 + $0x2c] sm:$0xf]
    %v51 = vld [vmem:[%s0 + $0x30] sm:$0xf]
    %v52 = vld [vmem:[%s0 + $0x34] sm:$0xf]
    %v53 = vld [vmem:[%s0 + $0x38] sm:$0xf]
    %v54 = vld [vmem:[%s0 + $0x3c] sm:$0xf]
    %v56 = vlaneseq
    %v57 = vshrl.u32 %v56, 7
    %v58 = vsub.s32 0, %v57
    %v59 = vrot.slane %v38, %v58
    %v77 = vunpack.c.l.b16 %v39
    %v78 = vunpack.c.l.b16 %v40
    %v79 = vunpack.c.l.b16 %v41
    %v80 = vunpack.c.l.b16 %v42
    %v81 = vunpack.c.l.b16 %v43
    %v82 = vunpack.c.l.b16 %v44
    %v83 = vunpack.c.l.b16 %v45
    %v84 = vunpack.c.l.b16 %v46
    %v85 = vunpack.c.l.b16 %v47
    %v86 = vunpack.c.l.b16 %v48
    %v87 = vunpack.c.l.b16 %v49
    %v88 = vunpack.c.l.b16 %v50
    %v89 = vunpack.c.l.b16 %v51
    %v90 = vunpack.c.l.b16 %v52
    %v91 = vunpack.c.l.b16 %v53
    %v92 = vunpack.c.l.b16 %v54
    %v93 = vpack.c.b16 %v78, %v77
    %v94 = vpack.c.b16 %v80, %v79
    %v95 = vpack.c.b16 %v82, %v81
    %v96 = vpack.c.b16 %v84, %v83
    %v97 = vpack.c.b16 %v86, %v85
    %v98 = vpack.c.b16 %v88, %v87
    %v99 = vpack.c.b16 %v90, %v89
    %v100 = vpack.c.b16 %v92, %v91
    %v125 = vunpack.c.l.b16 %v22
    %v126 = vunpack.c.l.b16 %v23
    %v127 = vunpack.c.l.b16 %v24
    %v128 = vunpack.c.l.b16 %v25
    %v129 = vunpack.c.l.b16 %v26
    %v130 = vunpack.c.l.b16 %v27
    %v131 = vunpack.c.l.b16 %v28
    %v132 = vunpack.c.l.b16 %v29
    %v133 = vunpack.c.l.b16 %v30
    %v134 = vunpack.c.l.b16 %v31
    %v135 = vunpack.c.l.b16 %v32
    %v136 = vunpack.c.l.b16 %v33
    %v137 = vunpack.c.l.b16 %v34
    %v138 = vunpack.c.l.b16 %v35
    %v139 = vunpack.c.l.b16 %v36
    %v140 = vunpack.c.l.b16 %v37
    %v141 = vpack.c.b16 %v126, %v125
    %v142 = vpack.c.b16 %v128, %v127
    %v143 = vpack.c.b16 %v130, %v129
    %v144 = vpack.c.b16 %v132, %v131
    %v145 = vpack.c.b16 %v134, %v133
    %v146 = vpack.c.b16 %v136, %v135
    %v147 = vpack.c.b16 %v138, %v137
    %v148 = vpack.c.b16 %v140, %v139
    %157 = vmatprep.subr.bf16.mxu0 0
    %158 = vmatpush1.bf16.msra.mxu0 %v148
    %159 = vmatprep.subr.bf16.mxu0 0
    %160 = vmatpush1.bf16.msra.mxu0 %v147
    %161 = vmatprep.subr.bf16.mxu0 0
    %162 = vmatpush1.bf16.msra.mxu0 %v146
    %163 = vmatprep.subr.bf16.mxu0 0
    %164 = vmatpush1.bf16.msra.mxu0 %v145
    %165 = vmatprep.subr.bf16.mxu0 0
    %166 = vmatpush1.bf16.msra.mxu0 %v144
    %167 = vmatprep.subr.bf16.mxu0 0
    %168 = vmatpush1.bf16.msra.mxu0 %v143
    %169 = vmatprep.subr.bf16.mxu0 0
    %170 = vmatpush1.bf16.msra.mxu0 %v142
    %171 = vmatprep.subr.bf16.mxu0 0
    %172 = vmatpush1.bf16.msra.mxu0 %v141
    %173 = vmatprep.subr.bf16.mxu0 0
    %174 = vmatpush2.bf16.msra.mxu0 0
    %175 = vmatprep.subr.bf16.mxu0 0
    %176 = vmatpush2.bf16.msra.mxu0 0
    %177 = vmatprep.subr.bf16.mxu0 0
    %178 = vmatpush2.bf16.msra.mxu0 0
    %179 = vmatprep.subr.bf16.mxu0 0
    %180 = vmatpush2.bf16.msra.mxu0 0
    %181 = vmatprep.subr.bf16.mxu0 0
    %182 = vmatpush2.bf16.msra.mxu0 0
    %183 = vmatprep.subr.bf16.mxu0 0
    %184 = vmatpush2.bf16.msra.mxu0 0
    %185 = vmatprep.subr.bf16.mxu0 0
    %186 = vmatpush2.bf16.msra.mxu0 0
    %187 = vmatprep.subr.bf16.mxu0 0
    %188 = vmatpush2.bf16.msra.mxu0 0
    %189 = vmatprep.mubr.bf16.mxu0 0
    %190 = vmatmul.mubr.bf16.gmra.mxu0 %v93
    %v191 = vpop.f32.mrf.mxu0
    %v192 = vadd.f32 %v59, %v191
    %v193 = vpop.f32.mrf.mxu0
    %v194 = vpop.f32.mrf.mxu0
    %v195 = vadd.f32 %v59, %v194
    %v196 = vpop.f32.mrf.mxu0
    %197 = vmatprep.mubr.bf16.mxu0 0
    %198 = vmatmul.mubr.bf16.gmra.mxu0 %v94
    %v199 = vpop.f32.mrf.mxu0
    %v200 = vadd.f32 %v59, %v199
    %v201 = vpop.f32.mrf.mxu0
    %v202 = vpop.f32.mrf.mxu0
    %v203 = vadd.f32 %v59, %v202
    %v204 = vpop.f32.mrf.mxu0
    %205 = vmatprep.mubr.bf16.mxu0 0
    %206 = vmatmul.mubr.bf16.gmra.mxu0 %v95
    %v207 = vpop.f32.mrf.mxu0
    %v208 = vadd.f32 %v59, %v207
    %v209 = vpop.f32.mrf.mxu0
    %v210 = vpop.f32.mrf.mxu0
    %v211 = vadd.f32 %v59, %v210
    %v212 = vpop.f32.mrf.mxu0
    %213 = vmatprep.mubr.bf16.mxu0 0
    %214 = vmatmul.mubr.bf16.gmra.mxu0 %v96
    %v215 = vpop.f32.mrf.mxu0
    %v216 = vadd.f32 %v59, %v215
    %v217 = vpop.f32.mrf.mxu0
    %v218 = vpop.f32.mrf.mxu0
    %v219 = vadd.f32 %v59, %v218
    %v220 = vpop.f32.mrf.mxu0
    %221 = vmatprep.mubr.bf16.mxu0 0
    %222 = vmatmul.mubr.bf16.gmra.mxu0 %v97
    %v223 = vpop.f32.mrf.mxu0
    %v224 = vadd.f32 %v59, %v223
    %v225 = vpop.f32.mrf.mxu0
    %v226 = vpop.f32.mrf.mxu0
    %v227 = vadd.f32 %v59, %v226
    %v228 = vpop.f32.mrf.mxu0
    %229 = vmatprep.mubr.bf16.mxu0 0
    %230 = vmatmul.mubr.bf16.gmra.mxu0 %v98
    %v231 = vpop.f32.mrf.mxu0
    %v232 = vadd.f32 %v59, %v231
    %v233 = vpop.f32.mrf.mxu0
    %v234 = vpop.f32.mrf.mxu0
    %v235 = vadd.f32 %v59, %v234
    %v236 = vpop.f32.mrf.mxu0
    %237 = vmatprep.mubr.bf16.mxu0 0
    %238 = vmatmul.mubr.bf16.gmra.mxu0 %v99
    %v239 = vpop.f32.mrf.mxu0
    %v240 = vadd.f32 %v59, %v239
    %v241 = vpop.f32.mrf.mxu0
    %v242 = vpop.f32.mrf.mxu0
    %v243 = vadd.f32 %v59, %v242
    %v244 = vpop.f32.mrf.mxu0
    %245 = vmatprep.mubr.bf16.mxu0 0
    %246 = vmatmul.mubr.bf16.gmra.mxu0 %v100
    %v247 = vpop.f32.mrf.mxu0
    %v248 = vadd.f32 %v59, %v247
    %v249 = vpop.f32.mrf.mxu0
    %v250 = vpop.f32.mrf.mxu0
    %v251 = vadd.f32 %v59, %v250
    %v252 = vpop.f32.mrf.mxu0
    %253 = vdwg.mxu0
    %v254 = vmax.f32 %v192, 0.0
    %v255 = vmax.f32 %v195, 0.0
    %v256 = vmax.f32 %v200, 0.0
    %v257 = vmax.f32 %v203, 0.0
    %v258 = vmax.f32 %v208, 0.0
    %v259 = vmax.f32 %v211, 0.0
    %v260 = vmax.f32 %v216, 0.0
    %v261 = vmax.f32 %v219, 0.0
    %v262 = vmax.f32 %v224, 0.0
    %v263 = vmax.f32 %v227, 0.0
    %v264 = vmax.f32 %v232, 0.0
    %v265 = vmax.f32 %v235, 0.0
    %v266 = vmax.f32 %v240, 0.0
    %v267 = vmax.f32 %v243, 0.0
    %v268 = vmax.f32 %v248, 0.0
    %v269 = vmax.f32 %v251, 0.0
    %v270 = vadd.f32 %v254, %v255
    %v271 = vadd.f32 %v270, %v256
    %v272 = vadd.f32 %v271, %v257
    %v273 = vadd.f32 %v272, %v258
    %v274 = vadd.f32 %v273, %v259
    %v275 = vadd.f32 %v274, %v260
    %v276 = vadd.f32 %v275, %v261
    %v277 = vadd.f32 %v276, %v262
    %v278 = vadd.f32 %v277, %v263
    %v279 = vadd.f32 %v278, %v264
    %v280 = vadd.f32 %v279, %v265
    %v281 = vadd.f32 %v280, %v266
    %v282 = vadd.f32 %v281, %v267
    %v283 = vadd.f32 %v282, %v268
    %v284 = vadd.f32 %v283, %v269
    %v285 = vrot.slane %v284, 4
    %v286 = vadd.f32 %v284, %v285
    %v287 = vrot.slane %v286, 2
    %v288 = vadd.f32 %v286, %v287
    %v289 = vrot.slane %v288, 1
    %v290 = vadd.f32 %v288, %v289
    %v291 = vadd.f32 %v290, 0.0
    %v292 = vld [vmem:[%s0 + $0x40] sm:$0xf]
    %v293 = vld [vmem:[%s0 + $0x44] sm:$0xf]
    %v294 = vld [vmem:[%s0 + $0x48] sm:$0xf]
    %v295 = vld [vmem:[%s0 + $0x4c] sm:$0xf]
    %v296 = vld [vmem:[%s0 + $0x50] sm:$0xf]
    %v297 = vld [vmem:[%s0 + $0x54] sm:$0xf]
    %v298 = vld [vmem:[%s0 + $0x58] sm:$0xf]
    %v299 = vld [vmem:[%s0 + $0x5c] sm:$0xf]
    %v300 = vld [vmem:[%s0 + $0x60] sm:$0xf]
    %v301 = vld [vmem:[%s0 + $0x64] sm:$0xf]
    %v302 = vld [vmem:[%s0 + $0x68] sm:$0xf]
    %v303 = vld [vmem:[%s0 + $0x6c] sm:$0xf]
    %v304 = vld [vmem:[%s0 + $0x70] sm:$0xf]
    %v305 = vld [vmem:[%s0 + $0x74] sm:$0xf]
    %v306 = vld [vmem:[%s0 + $0x78] sm:$0xf]
    %v307 = vld [vmem:[%s0 + $0x7c] sm:$0xf]
    %v324 = vunpack.c.l.b16 %v292
    %v325 = vunpack.c.l.b16 %v293
    %v326 = vunpack.c.l.b16 %v294
    %v327 = vunpack.c.l.b16 %v295
    %v328 = vunpack.c.l.b16 %v296
    %v329 = vunpack.c.l.b16 %v297
    %v330 = vunpack.c.l.b16 %v298
    %v331 = vunpack.c.l.b16 %v299
    %v332 = vunpack.c.l.b16 %v300
    %v333 = vunpack.c.l.b16 %v301
    %v334 = vunpack.c.l.b16 %v302
    %v335 = vunpack.c.l.b16 %v303
    %v336 = vunpack.c.l.b16 %v304
    %v337 = vunpack.c.l.b16 %v305
    %v338 = vunpack.c.l.b16 %v306
    %v339 = vunpack.c.l.b16 %v307
    %v340 = vpack.c.b16 %v325, %v324
    %v341 = vpack.c.b16 %v327, %v326
    %v342 = vpack.c.b16 %v329, %v328
    %v343 = vpack.c.b16 %v331, %v330
    %v344 = vpack.c.b16 %v333, %v332
    %v345 = vpack.c.b16 %v335, %v334
    %v346 = vpack.c.b16 %v337, %v336
    %v347 = vpack.c.b16 %v339, %v338
    %356 = vmatprep.subr.bf16.mxu0 0
    %357 = vmatpush1.bf16.msra.mxu0 %v148
    %358 = vmatprep.subr.bf16.mxu0 0
    %359 = vmatpush1.bf16.msra.mxu0 %v147
    %360 = vmatprep.subr.bf16.mxu0 0
    %361 = vmatpush1.bf16.msra.mxu0 %v146
    %362 = vmatprep.subr.bf16.mxu0 0
    %363 = vmatpush1.bf16.msra.mxu0 %v145
    %364 = vmatprep.subr.bf16.mxu0 0
    %365 = vmatpush1.bf16.msra.mxu0 %v144
    %366 = vmatprep.subr.bf16.mxu0 0
    %367 = vmatpush1.bf16.msra.mxu0 %v143
    %368 = vmatprep.subr.bf16.mxu0 0
    %369 = vmatpush1.bf16.msra.mxu0 %v142
    %370 = vmatprep.subr.bf16.mxu0 0
    %371 = vmatpush1.bf16.msra.mxu0 %v141
    %372 = vmatprep.subr.bf16.mxu0 0
    %373 = vmatpush2.bf16.msra.mxu0 0
    %374 = vmatprep.subr.bf16.mxu0 0
    %375 = vmatpush2.bf16.msra.mxu0 0
    %376 = vmatprep.subr.bf16.mxu0 0
    %377 = vmatpush2.bf16.msra.mxu0 0
    %378 = vmatprep.subr.bf16.mxu0 0
    %379 = vmatpush2.bf16.msra.mxu0 0
    %380 = vmatprep.subr.bf16.mxu0 0
    %381 = vmatpush2.bf16.msra.mxu0 0
    %382 = vmatprep.subr.bf16.mxu0 0
    %383 = vmatpush2.bf16.msra.mxu0 0
    %384 = vmatprep.subr.bf16.mxu0 0
    %385 = vmatpush2.bf16.msra.mxu0 0
    %386 = vmatprep.subr.bf16.mxu0 0
    %387 = vmatpush2.bf16.msra.mxu0 0
    %388 = vmatprep.mubr.bf16.mxu0 0
    %389 = vmatmul.mubr.bf16.gmra.mxu0 %v340
    %v390 = vpop.f32.mrf.mxu0
    %v391 = vadd.f32 %v59, %v390
    %v392 = vpop.f32.mrf.mxu0
    %v393 = vpop.f32.mrf.mxu0
    %v394 = vadd.f32 %v59, %v393
    %v395 = vpop.f32.mrf.mxu0
    %396 = vmatprep.mubr.bf16.mxu0 0
    %397 = vmatmul.mubr.bf16.gmra.mxu0 %v341
    %v398 = vpop.f32.mrf.mxu0
    %v399 = vadd.f32 %v59, %v398
    %v400 = vpop.f32.mrf.mxu0
    %v401 = vpop.f32.mrf.mxu0
    %v402 = vadd.f32 %v59, %v401
    %v403 = vpop.f32.mrf.mxu0
    %404 = vmatprep.mubr.bf16.mxu0 0
    %405 = vmatmul.mubr.bf16.gmra.mxu0 %v342
    %v406 = vpop.f32.mrf.mxu0
    %v407 = vadd.f32 %v59, %v406
    %v408 = vpop.f32.mrf.mxu0
    %v409 = vpop.f32.mrf.mxu0
    %v410 = vadd.f32 %v59, %v409
    %v411 = vpop.f32.mrf.mxu0
    %412 = vmatprep.mubr.bf16.mxu0 0
    %413 = vmatmul.mubr.bf16.gmra.mxu0 %v343
    %v414 = vpop.f32.mrf.mxu0
    %v415 = vadd.f32 %v59, %v414
    %v416 = vpop.f32.mrf.mxu0
    %v417 = vpop.f32.mrf.mxu0
    %v418 = vadd.f32 %v59, %v417
    %v419 = vpop.f32.mrf.mxu0
    %420 = vmatprep.mubr.bf16.mxu0 0
    %421 = vmatmul.mubr.bf16.gmra.mxu0 %v344
    %v422 = vpop.f32.mrf.mxu0
    %v423 = vadd.f32 %v59, %v422
    %v424 = vpop.f32.mrf.mxu0
    %v425 = vpop.f32.mrf.mxu0
    %v426 = vadd.f32 %v59, %v425
    %v427 = vpop.f32.mrf.mxu0
    %428 = vmatprep.mubr.bf16.mxu0 0
    %429 = vmatmul.mubr.bf16.gmra.mxu0 %v345
    %v430 = vpop.f32.mrf.mxu0
    %v431 = vadd.f32 %v59, %v430
    %v432 = vpop.f32.mrf.mxu0
    %v433 = vpop.f32.mrf.mxu0
    %v434 = vadd.f32 %v59, %v433
    %v435 = vpop.f32.mrf.mxu0
    %436 = vmatprep.mubr.bf16.mxu0 0
    %437 = vmatmul.mubr.bf16.gmra.mxu0 %v346
    %v438 = vpop.f32.mrf.mxu0
    %v439 = vadd.f32 %v59, %v438
    %v440 = vpop.f32.mrf.mxu0
    %v441 = vpop.f32.mrf.mxu0
    %v442 = vadd.f32 %v59, %v441
    %v443 = vpop.f32.mrf.mxu0
    %444 = vmatprep.mubr.bf16.mxu0 0
    %445 = vmatmul.mubr.bf16.gmra.mxu0 %v347
    %v446 = vpop.f32.mrf.mxu0
    %v447 = vadd.f32 %v59, %v446
    %v448 = vpop.f32.mrf.mxu0
    %v449 = vpop.f32.mrf.mxu0
    %v450 = vadd.f32 %v59, %v449
    %v451 = vpop.f32.mrf.mxu0
    %452 = vdwg.mxu0
    %v453 = vmax.f32 %v391, 0.0
    %v454 = vmax.f32 %v394, 0.0
    %v455 = vmax.f32 %v399, 0.0
    %v456 = vmax.f32 %v402, 0.0
    %v457 = vmax.f32 %v407, 0.0
    %v458 = vmax.f32 %v410, 0.0
    %v459 = vmax.f32 %v415, 0.0
    %v460 = vmax.f32 %v418, 0.0
    %v461 = vmax.f32 %v423, 0.0
    %v462 = vmax.f32 %v426, 0.0
    %v463 = vmax.f32 %v431, 0.0
    %v464 = vmax.f32 %v434, 0.0
    %v465 = vmax.f32 %v439, 0.0
    %v466 = vmax.f32 %v442, 0.0
    %v467 = vmax.f32 %v447, 0.0
    %v468 = vmax.f32 %v450, 0.0
    %v469 = vadd.f32 %v453, %v454
    %v470 = vadd.f32 %v469, %v455
    %v471 = vadd.f32 %v470, %v456
    %v472 = vadd.f32 %v471, %v457
    %v473 = vadd.f32 %v472, %v458
    %v474 = vadd.f32 %v473, %v459
    %v475 = vadd.f32 %v474, %v460
    %v476 = vadd.f32 %v475, %v461
    %v477 = vadd.f32 %v476, %v462
    %v478 = vadd.f32 %v477, %v463
    %v479 = vadd.f32 %v478, %v464
    %v480 = vadd.f32 %v479, %v465
    %v481 = vadd.f32 %v480, %v466
    %v482 = vadd.f32 %v481, %v467
    %v483 = vadd.f32 %v482, %v468
    %v484 = vrot.slane %v483, 4
    %v485 = vadd.f32 %v483, %v484
    %v486 = vrot.slane %v485, 2
    %v487 = vadd.f32 %v485, %v486
    %v488 = vrot.slane %v487, 1
    %v489 = vadd.f32 %v487, %v488
    %v490 = vadd.f32 %v291, %v489
    %v491 = vld [vmem:[%s0 + $0x80] sm:$0xf]
    %v492 = vld [vmem:[%s0 + $0x84] sm:$0xf]
    %v493 = vld [vmem:[%s0 + $0x88] sm:$0xf]
    %v494 = vld [vmem:[%s0 + $0x8c] sm:$0xf]
    %v495 = vld [vmem:[%s0 + $0x90] sm:$0xf]
    %v496 = vld [vmem:[%s0 + $0x94] sm:$0xf]
    %v497 = vld [vmem:[%s0 + $0x98] sm:$0xf]
    %v498 = vld [vmem:[%s0 + $0x9c] sm:$0xf]
    %v499 = vld [vmem:[%s0 + $0xa0] sm:$0xf]
    %v500 = vld [vmem:[%s0 + $0xa4] sm:$0xf]
    %v501 = vld [vmem:[%s0 + $0xa8] sm:$0xf]
    %v502 = vld [vmem:[%s0 + $0xac] sm:$0xf]
    %v503 = vld [vmem:[%s0 + $0xb0] sm:$0xf]
    %v504 = vld [vmem:[%s0 + $0xb4] sm:$0xf]
    %v505 = vld [vmem:[%s0 + $0xb8] sm:$0xf]
    %v506 = vld [vmem:[%s0 + $0xbc] sm:$0xf]
    %v523 = vunpack.c.l.b16 %v491
    %v524 = vunpack.c.l.b16 %v492
    %v525 = vunpack.c.l.b16 %v493
    %v526 = vunpack.c.l.b16 %v494
    %v527 = vunpack.c.l.b16 %v495
    %v528 = vunpack.c.l.b16 %v496
    %v529 = vunpack.c.l.b16 %v497
    %v530 = vunpack.c.l.b16 %v498
    %v531 = vunpack.c.l.b16 %v499
    %v532 = vunpack.c.l.b16 %v500
    %v533 = vunpack.c.l.b16 %v501
    %v534 = vunpack.c.l.b16 %v502
    %v535 = vunpack.c.l.b16 %v503
    %v536 = vunpack.c.l.b16 %v504
    %v537 = vunpack.c.l.b16 %v505
    %v538 = vunpack.c.l.b16 %v506
    %v539 = vpack.c.b16 %v524, %v523
    %v540 = vpack.c.b16 %v526, %v525
    %v541 = vpack.c.b16 %v528, %v527
    %v542 = vpack.c.b16 %v530, %v529
    %v543 = vpack.c.b16 %v532, %v531
    %v544 = vpack.c.b16 %v534, %v533
    %v545 = vpack.c.b16 %v536, %v535
    %v546 = vpack.c.b16 %v538, %v537
    %555 = vmatprep.subr.bf16.mxu0 0
    %556 = vmatpush1.bf16.msra.mxu0 %v148
    %557 = vmatprep.subr.bf16.mxu0 0
    %558 = vmatpush1.bf16.msra.mxu0 %v147
    %559 = vmatprep.subr.bf16.mxu0 0
    %560 = vmatpush1.bf16.msra.mxu0 %v146
    %561 = vmatprep.subr.bf16.mxu0 0
    %562 = vmatpush1.bf16.msra.mxu0 %v145
    %563 = vmatprep.subr.bf16.mxu0 0
    %564 = vmatpush1.bf16.msra.mxu0 %v144
    %565 = vmatprep.subr.bf16.mxu0 0
    %566 = vmatpush1.bf16.msra.mxu0 %v143
    %567 = vmatprep.subr.bf16.mxu0 0
    %568 = vmatpush1.bf16.msra.mxu0 %v142
    %569 = vmatprep.subr.bf16.mxu0 0
    %570 = vmatpush1.bf16.msra.mxu0 %v141
    %571 = vmatprep.subr.bf16.mxu0 0
    %572 = vmatpush2.bf16.msra.mxu0 0
    %573 = vmatprep.subr.bf16.mxu0 0
    %574 = vmatpush2.bf16.msra.mxu0 0
    %575 = vmatprep.subr.bf16.mxu0 0
    %576 = vmatpush2.bf16.msra.mxu0 0
    %577 = vmatprep.subr.bf16.mxu0 0
    %578 = vmatpush2.bf16.msra.mxu0 0
    %579 = vmatprep.subr.bf16.mxu0 0
    %580 = vmatpush2.bf16.msra.mxu0 0
    %581 = vmatprep.subr.bf16.mxu0 0
    %582 = vmatpush2.bf16.msra.mxu0 0
    %583 = vmatprep.subr.bf16.mxu0 0
    %584 = vmatpush2.bf16.msra.mxu0 0
    %585 = vmatprep.subr.bf16.mxu0 0
    %586 = vmatpush2.bf16.msra.mxu0 0
    %587 = vmatprep.mubr.bf16.mxu0 0
    %588 = vmatmul.mubr.bf16.gmra.mxu0 %v539
    %v589 = vpop.f32.mrf.mxu0
    %v590 = vadd.f32 %v59, %v589
    %v591 = vpop.f32.mrf.mxu0
    %v592 = vpop.f32.mrf.mxu0
    %v593 = vadd.f32 %v59, %v592
    %v594 = vpop.f32.mrf.mxu0
    %595 = vmatprep.mubr.bf16.mxu0 0
    %596 = vmatmul.mubr.bf16.gmra.mxu0 %v540
    %v597 = vpop.f32.mrf.mxu0
    %v598 = vadd.f32 %v59, %v597
    %v599 = vpop.f32.mrf.mxu0
    %v600 = vpop.f32.mrf.mxu0
    %v601 = vadd.f32 %v59, %v600
    %v602 = vpop.f32.mrf.mxu0
    %603 = vmatprep.mubr.bf16.mxu0 0
    %604 = vmatmul.mubr.bf16.gmra.mxu0 %v541
    %v605 = vpop.f32.mrf.mxu0
    %v606 = vadd.f32 %v59, %v605
    %v607 = vpop.f32.mrf.mxu0
    %v608 = vpop.f32.mrf.mxu0
    %v609 = vadd.f32 %v59, %v608
    %v610 = vpop.f32.mrf.mxu0
    %611 = vmatprep.mubr.bf16.mxu0 0
    %612 = vmatmul.mubr.bf16.gmra.mxu0 %v542
    %v613 = vpop.f32.mrf.mxu0
    %v614 = vadd.f32 %v59, %v613
    %v615 = vpop.f32.mrf.mxu0
    %v616 = vpop.f32.mrf.mxu0
    %v617 = vadd.f32 %v59, %v616
    %v618 = vpop.f32.mrf.mxu0
    %619 = vmatprep.mubr.bf16.mxu0 0
    %620 = vmatmul.mubr.bf16.gmra.mxu0 %v543
    %v621 = vpop.f32.mrf.mxu0
    %v622 = vadd.f32 %v59, %v621
    %v623 = vpop.f32.mrf.mxu0
    %v624 = vpop.f32.mrf.mxu0
    %v625 = vadd.f32 %v59, %v624
    %v626 = vpop.f32.mrf.mxu0
    %627 = vmatprep.mubr.bf16.mxu0 0
    %628 = vmatmul.mubr.bf16.gmra.mxu0 %v544
    %v629 = vpop.f32.mrf.mxu0
    %v630 = vadd.f32 %v59, %v629
    %v631 = vpop.f32.mrf.mxu0
    %v632 = vpop.f32.mrf.mxu0
    %v633 = vadd.f32 %v59, %v632
    %v634 = vpop.f32.mrf.mxu0
    %635 = vmatprep.mubr.bf16.mxu0 0
    %636 = vmatmul.mubr.bf16.gmra.mxu0 %v545
    %v637 = vpop.f32.mrf.mxu0
    %v638 = vadd.f32 %v59, %v637
    %v639 = vpop.f32.mrf.mxu0
    %v640 = vpop.f32.mrf.mxu0
    %v641 = vadd.f32 %v59, %v640
    %v642 = vpop.f32.mrf.mxu0
    %643 = vmatprep.mubr.bf16.mxu0 0
    %644 = vmatmul.mubr.bf16.gmra.mxu0 %v546
    %v645 = vpop.f32.mrf.mxu0
    %v646 = vadd.f32 %v59, %v645
    %v647 = vpop.f32.mrf.mxu0
    %v648 = vpop.f32.mrf.mxu0
    %v649 = vadd.f32 %v59, %v648
    %v650 = vpop.f32.mrf.mxu0
    %651 = vdwg.mxu0
    %v652 = vmax.f32 %v590, 0.0
    %v653 = vmax.f32 %v593, 0.0
    %v654 = vmax.f32 %v598, 0.0
    %v655 = vmax.f32 %v601, 0.0
    %v656 = vmax.f32 %v606, 0.0
    %v657 = vmax.f32 %v609, 0.0
    %v658 = vmax.f32 %v614, 0.0
    %v659 = vmax.f32 %v617, 0.0
    %v660 = vmax.f32 %v622, 0.0
    %v661 = vmax.f32 %v625, 0.0
    %v662 = vmax.f32 %v630, 0.0
    %v663 = vmax.f32 %v633, 0.0
    %v664 = vmax.f32 %v638, 0.0
    %v665 = vmax.f32 %v641, 0.0
    %v666 = vmax.f32 %v646, 0.0
    %v667 = vmax.f32 %v649, 0.0
    %v668 = vadd.f32 %v652, %v653
    %v669 = vadd.f32 %v668, %v654
    %v670 = vadd.f32 %v669, %v655
    %v671 = vadd.f32 %v670, %v656
    %v672 = vadd.f32 %v671, %v657
    %v673 = vadd.f32 %v672, %v658
    %v674 = vadd.f32 %v673, %v659
    %v675 = vadd.f32 %v674, %v660
    %v676 = vadd.f32 %v675, %v661
    %v677 = vadd.f32 %v676, %v662
    %v678 = vadd.f32 %v677, %v663
    %v679 = vadd.f32 %v678, %v664
    %v680 = vadd.f32 %v679, %v665
    %v681 = vadd.f32 %v680, %v666
    %v682 = vadd.f32 %v681, %v667
    %v683 = vrot.slane %v682, 4
    %v684 = vadd.f32 %v682, %v683
    %v685 = vrot.slane %v684, 2
    %v686 = vadd.f32 %v684, %v685
    %v687 = vrot.slane %v686, 1
    %v688 = vadd.f32 %v686, %v687
    %v689 = vadd.f32 %v688, 0.0
    %v690 = vld [vmem:[%s0 + $0xc0] sm:$0xf]
    %v691 = vld [vmem:[%s0 + $0xc4] sm:$0xf]
    %v692 = vld [vmem:[%s0 + $0xc8] sm:$0xf]
    %v693 = vld [vmem:[%s0 + $0xcc] sm:$0xf]
    %v694 = vld [vmem:[%s0 + $0xd0] sm:$0xf]
    %v695 = vld [vmem:[%s0 + $0xd4] sm:$0xf]
    %v696 = vld [vmem:[%s0 + $0xd8] sm:$0xf]
    %v697 = vld [vmem:[%s0 + $0xdc] sm:$0xf]
    %v698 = vld [vmem:[%s0 + $0xe0] sm:$0xf]
    %v699 = vld [vmem:[%s0 + $0xe4] sm:$0xf]
    %v700 = vld [vmem:[%s0 + $0xe8] sm:$0xf]
    %v701 = vld [vmem:[%s0 + $0xec] sm:$0xf]
    %v702 = vld [vmem:[%s0 + $0xf0] sm:$0xf]
    %v703 = vld [vmem:[%s0 + $0xf4] sm:$0xf]
    %v704 = vld [vmem:[%s0 + $0xf8] sm:$0xf]
    %v705 = vld [vmem:[%s0 + $0xfc] sm:$0xf]
    %v722 = vunpack.c.l.b16 %v690
    %v723 = vunpack.c.l.b16 %v691
    %v724 = vunpack.c.l.b16 %v692
    %v725 = vunpack.c.l.b16 %v693
    %v726 = vunpack.c.l.b16 %v694
    %v727 = vunpack.c.l.b16 %v695
    %v728 = vunpack.c.l.b16 %v696
    %v729 = vunpack.c.l.b16 %v697
    %v730 = vunpack.c.l.b16 %v698
    %v731 = vunpack.c.l.b16 %v699
    %v732 = vunpack.c.l.b16 %v700
    %v733 = vunpack.c.l.b16 %v701
    %v734 = vunpack.c.l.b16 %v702
    %v735 = vunpack.c.l.b16 %v703
    %v736 = vunpack.c.l.b16 %v704
    %v737 = vunpack.c.l.b16 %v705
    %v738 = vpack.c.b16 %v723, %v722
    %v739 = vpack.c.b16 %v725, %v724
    %v740 = vpack.c.b16 %v727, %v726
    %v741 = vpack.c.b16 %v729, %v728
    %v742 = vpack.c.b16 %v731, %v730
    %v743 = vpack.c.b16 %v733, %v732
    %v744 = vpack.c.b16 %v735, %v734
    %v745 = vpack.c.b16 %v737, %v736
    %754 = vmatprep.subr.bf16.mxu0 0
    %755 = vmatpush1.bf16.msra.mxu0 %v148
    %756 = vmatprep.subr.bf16.mxu0 0
    %757 = vmatpush1.bf16.msra.mxu0 %v147
    %758 = vmatprep.subr.bf16.mxu0 0
    %759 = vmatpush1.bf16.msra.mxu0 %v146
    %760 = vmatprep.subr.bf16.mxu0 0
    %761 = vmatpush1.bf16.msra.mxu0 %v145
    %762 = vmatprep.subr.bf16.mxu0 0
    %763 = vmatpush1.bf16.msra.mxu0 %v144
    %764 = vmatprep.subr.bf16.mxu0 0
    %765 = vmatpush1.bf16.msra.mxu0 %v143
    %766 = vmatprep.subr.bf16.mxu0 0
    %767 = vmatpush1.bf16.msra.mxu0 %v142
    %768 = vmatprep.subr.bf16.mxu0 0
    %769 = vmatpush1.bf16.msra.mxu0 %v141
    %770 = vmatprep.subr.bf16.mxu0 0
    %771 = vmatpush2.bf16.msra.mxu0 0
    %772 = vmatprep.subr.bf16.mxu0 0
    %773 = vmatpush2.bf16.msra.mxu0 0
    %774 = vmatprep.subr.bf16.mxu0 0
    %775 = vmatpush2.bf16.msra.mxu0 0
    %776 = vmatprep.subr.bf16.mxu0 0
    %777 = vmatpush2.bf16.msra.mxu0 0
    %778 = vmatprep.subr.bf16.mxu0 0
    %779 = vmatpush2.bf16.msra.mxu0 0
    %780 = vmatprep.subr.bf16.mxu0 0
    %781 = vmatpush2.bf16.msra.mxu0 0
    %782 = vmatprep.subr.bf16.mxu0 0
    %783 = vmatpush2.bf16.msra.mxu0 0
    %784 = vmatprep.subr.bf16.mxu0 0
    %785 = vmatpush2.bf16.msra.mxu0 0
    %786 = vmatprep.mubr.bf16.mxu0 0
    %787 = vmatmul.mubr.bf16.gmra.mxu0 %v738
    %v788 = vpop.f32.mrf.mxu0
    %v789 = vadd.f32 %v59, %v788
    %v790 = vpop.f32.mrf.mxu0
    %v791 = vpop.f32.mrf.mxu0
    %v792 = vadd.f32 %v59, %v791
    %v793 = vpop.f32.mrf.mxu0
    %794 = vmatprep.mubr.bf16.mxu0 0
    %795 = vmatmul.mubr.bf16.gmra.mxu0 %v739
    %v796 = vpop.f32.mrf.mxu0
    %v797 = vadd.f32 %v59, %v796
    %v798 = vpop.f32.mrf.mxu0
    %v799 = vpop.f32.mrf.mxu0
    %v800 = vadd.f32 %v59, %v799
    %v801 = vpop.f32.mrf.mxu0
    %802 = vmatprep.mubr.bf16.mxu0 0
    %803 = vmatmul.mubr.bf16.gmra.mxu0 %v740
    %v804 = vpop.f32.mrf.mxu0
    %v805 = vadd.f32 %v59, %v804
    %v806 = vpop.f32.mrf.mxu0
    %v807 = vpop.f32.mrf.mxu0
    %v808 = vadd.f32 %v59, %v807
    %v809 = vpop.f32.mrf.mxu0
    %810 = vmatprep.mubr.bf16.mxu0 0
    %811 = vmatmul.mubr.bf16.gmra.mxu0 %v741
    %v812 = vpop.f32.mrf.mxu0
    %v813 = vadd.f32 %v59, %v812
    %v814 = vpop.f32.mrf.mxu0
    %v815 = vpop.f32.mrf.mxu0
    %v816 = vadd.f32 %v59, %v815
    %v817 = vpop.f32.mrf.mxu0
    %818 = vmatprep.mubr.bf16.mxu0 0
    %819 = vmatmul.mubr.bf16.gmra.mxu0 %v742
    %v820 = vpop.f32.mrf.mxu0
    %v821 = vadd.f32 %v59, %v820
    %v822 = vpop.f32.mrf.mxu0
    %v823 = vpop.f32.mrf.mxu0
    %v824 = vadd.f32 %v59, %v823
    %v825 = vpop.f32.mrf.mxu0
    %826 = vmatprep.mubr.bf16.mxu0 0
    %827 = vmatmul.mubr.bf16.gmra.mxu0 %v743
    %v828 = vpop.f32.mrf.mxu0
    %v829 = vadd.f32 %v59, %v828
    %v830 = vpop.f32.mrf.mxu0
    %v831 = vpop.f32.mrf.mxu0
    %v832 = vadd.f32 %v59, %v831
    %v833 = vpop.f32.mrf.mxu0
    %834 = vmatprep.mubr.bf16.mxu0 0
    %835 = vmatmul.mubr.bf16.gmra.mxu0 %v744
    %v836 = vpop.f32.mrf.mxu0
    %v837 = vadd.f32 %v59, %v836
    %v838 = vpop.f32.mrf.mxu0
    %v839 = vpop.f32.mrf.mxu0
    %v840 = vadd.f32 %v59, %v839
    %v841 = vpop.f32.mrf.mxu0
    %842 = vmatprep.mubr.bf16.mxu0 0
    %843 = vmatmul.mubr.bf16.gmra.mxu0 %v745
    %v844 = vpop.f32.mrf.mxu0
    %v845 = vadd.f32 %v59, %v844
    %v846 = vpop.f32.mrf.mxu0
    %v847 = vpop.f32.mrf.mxu0
    %v848 = vadd.f32 %v59, %v847
    %v849 = vpop.f32.mrf.mxu0
    %850 = vdwg.mxu0
    %v851 = vmax.f32 %v789, 0.0
    %v852 = vmax.f32 %v792, 0.0
    %v853 = vmax.f32 %v797, 0.0
    %v854 = vmax.f32 %v800, 0.0
    %v855 = vmax.f32 %v805, 0.0
    %v856 = vmax.f32 %v808, 0.0
    %v857 = vmax.f32 %v813, 0.0
    %v858 = vmax.f32 %v816, 0.0
    %v859 = vmax.f32 %v821, 0.0
    %v860 = vmax.f32 %v824, 0.0
    %v861 = vmax.f32 %v829, 0.0
    %v862 = vmax.f32 %v832, 0.0
    %v863 = vmax.f32 %v837, 0.0
    %v864 = vmax.f32 %v840, 0.0
    %v865 = vmax.f32 %v845, 0.0
    %v866 = vmax.f32 %v848, 0.0
    %v867 = vadd.f32 %v851, %v852
    %v868 = vadd.f32 %v867, %v853
    %v869 = vadd.f32 %v868, %v854
    %v870 = vadd.f32 %v869, %v855
    %v871 = vadd.f32 %v870, %v856
    %v872 = vadd.f32 %v871, %v857
    %v873 = vadd.f32 %v872, %v858
    %v874 = vadd.f32 %v873, %v859
    %v875 = vadd.f32 %v874, %v860
    %v876 = vadd.f32 %v875, %v861
    %v877 = vadd.f32 %v876, %v862
    %v878 = vadd.f32 %v877, %v863
    %v879 = vadd.f32 %v878, %v864
    %v880 = vadd.f32 %v879, %v865
    %v881 = vadd.f32 %v880, %v866
    %v882 = vrot.slane %v881, 4
    %v883 = vadd.f32 %v881, %v882
    %v884 = vrot.slane %v883, 2
    %v885 = vadd.f32 %v883, %v884
    %v886 = vrot.slane %v885, 1
    %v887 = vadd.f32 %v885, %v886
    %v888 = vadd.f32 %v689, %v887
    %vm889 = vcmask 1040384
    %v890 = vsel %vm889, %v490, %v888
    %v891 = vpack.c.bf16 %v890, %v890
    %v892 = vld [vmem:[%s3] sm:$0xf]
    %v893 = vld [vmem:[%s3 + $0x4] sm:$0xf]
    %v894 = vld [vmem:[%s3 + $0x8] sm:$0xf]
    %v895 = vld [vmem:[%s3 + $0xc] sm:$0xf]
    %v896 = vld [vmem:[%s3 + $0x10] sm:$0xf]
    %v897 = vld [vmem:[%s3 + $0x14] sm:$0xf]
    %v898 = vld [vmem:[%s3 + $0x18] sm:$0xf]
    %v899 = vld [vmem:[%s3 + $0x1c] sm:$0xf]
    %v900 = vld [vmem:[%s3 + $0x20] sm:$0xf]
    %v901 = vld [vmem:[%s3 + $0x24] sm:$0xf]
    %v902 = vld [vmem:[%s3 + $0x28] sm:$0xf]
    %v903 = vld [vmem:[%s3 + $0x2c] sm:$0xf]
    %v904 = vld [vmem:[%s3 + $0x30] sm:$0xf]
    %v905 = vld [vmem:[%s3 + $0x34] sm:$0xf]
    %v906 = vld [vmem:[%s3 + $0x38] sm:$0xf]
    %v907 = vld [vmem:[%s3 + $0x3c] sm:$0xf]
    %v908 = vld [vmem:[%s4] sm:$0x1]
    %v910 = vlaneseq
    %v911 = vshrl.u32 %v910, 7
    %v912 = vsub.s32 0, %v911
    %v913 = vrot.slane %v908, %v912
    %v931 = vunpack.c.l.b16 %v892
    %v932 = vunpack.c.l.b16 %v893
    %v933 = vunpack.c.l.b16 %v894
    %v934 = vunpack.c.l.b16 %v895
    %v935 = vunpack.c.l.b16 %v896
    %v936 = vunpack.c.l.b16 %v897
    %v937 = vunpack.c.l.b16 %v898
    %v938 = vunpack.c.l.b16 %v899
    %v939 = vunpack.c.l.b16 %v900
    %v940 = vunpack.c.l.b16 %v901
    %v941 = vunpack.c.l.b16 %v902
    %v942 = vunpack.c.l.b16 %v903
    %v943 = vunpack.c.l.b16 %v904
    %v944 = vunpack.c.l.b16 %v905
    %v945 = vunpack.c.l.b16 %v906
    %v946 = vunpack.c.l.b16 %v907
    %v947 = vpack.c.b16 %v932, %v931
    %v948 = vpack.c.b16 %v934, %v933
    %v949 = vpack.c.b16 %v936, %v935
    %v950 = vpack.c.b16 %v938, %v937
    %v951 = vpack.c.b16 %v940, %v939
    %v952 = vpack.c.b16 %v942, %v941
    %v953 = vpack.c.b16 %v944, %v943
    %v954 = vpack.c.b16 %v946, %v945
    %963 = vmatprep.subr.bf16.mxu0 0
    %964 = vmatpush1.bf16.msra.mxu0 %v954
    %965 = vmatprep.subr.bf16.mxu0 0
    %966 = vmatpush1.bf16.msra.mxu0 %v953
    %967 = vmatprep.subr.bf16.mxu0 0
    %968 = vmatpush1.bf16.msra.mxu0 %v952
    %969 = vmatprep.subr.bf16.mxu0 0
    %970 = vmatpush1.bf16.msra.mxu0 %v951
    %971 = vmatprep.subr.bf16.mxu0 0
    %972 = vmatpush1.bf16.msra.mxu0 %v950
    %973 = vmatprep.subr.bf16.mxu0 0
    %974 = vmatpush1.bf16.msra.mxu0 %v949
    %975 = vmatprep.subr.bf16.mxu0 0
    %976 = vmatpush1.bf16.msra.mxu0 %v948
    %977 = vmatprep.subr.bf16.mxu0 0
    %978 = vmatpush1.bf16.msra.mxu0 %v947
    %979 = vmatprep.subr.bf16.mxu0 0
    %980 = vmatpush2.bf16.msra.mxu0 0
    %981 = vmatprep.subr.bf16.mxu0 0
    %982 = vmatpush2.bf16.msra.mxu0 0
    %983 = vmatprep.subr.bf16.mxu0 0
    %984 = vmatpush2.bf16.msra.mxu0 0
    %985 = vmatprep.subr.bf16.mxu0 0
    %986 = vmatpush2.bf16.msra.mxu0 0
    %987 = vmatprep.subr.bf16.mxu0 0
    %988 = vmatpush2.bf16.msra.mxu0 0
    %989 = vmatprep.subr.bf16.mxu0 0
    %990 = vmatpush2.bf16.msra.mxu0 0
    %991 = vmatprep.subr.bf16.mxu0 0
    %992 = vmatpush2.bf16.msra.mxu0 0
    %993 = vmatprep.subr.bf16.mxu0 0
    %994 = vmatpush2.bf16.msra.mxu0 0
    %995 = vmatprep.mubr.bf16.mxu0 0
    %996 = vmatmul.mubr.bf16.gmra.mxu0 %v891
    %v997 = vpop.f32.mrf.mxu0
    %v998 = vadd.f32 %v913, %v997
    %v999 = vpop.f32.mrf.mxu0
    %v1000 = vpop.f32.mrf.mxu0
    %v1001 = vpop.f32.mrf.mxu0
    %1002 = vdwg.mxu0
    %1003 = vst [vmem:[#allocation2] sm:$0x3] %v998
    // Predicated region
    $region22: #{water_backbone_only.1} parent=1 // pred_check
      _
    $region23: #{water_backbone_only.1} parent=1 // pred_check_branch
      %1005 = sbr.rel (0) target = $region25
    $region24: #{water_backbone_only.1} parent=1 // pred_region
      %s1007 = ssub.s32 32, 32
      %1008 = vsyncadd [#allocation3], %s1007
      %s1010 = sshll.u32 [#allocation2], 4
      %s1011 = int_to_ptr.vmem [resolvable:$true] %s1010
      %1013 = dma.vmem_to_hbm [thread:$0]  %s1011, 32, %s5, [#allocation3]
    $region25: #{water_backbone_only.1} parent=1 // pred_fallthru
      _
    // Predicated region
    $region26: #{water_backbone_only.1} parent=1 // pred_check
      _
    $region27: #{water_backbone_only.1} parent=1 // pred_check_branch
      %1015 = sbr.rel (0) target = $region29
    $region28: #{water_backbone_only.1} parent=1 // pred_region
      %1016 = dma.done [#allocation3], 32
    $region29: #{water_backbone_only.1} parent=1 // pred_fallthru
      _
    %1017 = vsyncpa [#allocation3], 1

</llo_original>
